<compile_context>
chip_gen: v7x
topology: tpu7x:2x2x1
jax: 0.10.0
libtpu: 0.0.40
codegen_flags: <defaults>
</compile_context>

<pallas_src>
import jax
import jax.numpy as jnp
from jax.experimental import pallas as pl
from jax.experimental.pallas import tpu as pltpu

N_IN = 1248    # Cin
N_OUT = 52     # Cout (logical)
COUT_PAD = 128 # Cout padded to a lane-dense multiple of 128


def conv1x1_kernel(x_ref, w_ref, b_ref, o_ref):
    # x_ref: (M, K) f32   w_ref: (K, COUT_PAD) bf16   b_ref: (1, COUT_PAD) f32
    # o_ref: (M, COUT_PAD) f32
    x_bf16 = x_ref[...].astype(jnp.bfloat16)               # simple pack, feeds MXU bf16 path
    acc = jnp.dot(x_bf16, w_ref[...],
                  preferred_element_type=jnp.float32)       # f32 accumulation on MXU
    o_ref[...] = acc + b_ref[...]                           # f32 epilogue, lane-dense store


def prepare_params(weight, bias):
    """One-time prep: [Cout, Cin, 1, 1] -> W [Cin, 128] bf16 (zero-padded),
    B [1, 128] f32 (zero-padded)."""
    cout, cin = weight.shape[0], weight.shape[1]
    w2d = jnp.asarray(weight).reshape(cout, cin).T.astype(jnp.bfloat16)   # [K, Cout]
    w_pad = jnp.zeros((cin, COUT_PAD), jnp.bfloat16).at[:, :cout].set(w2d)
    b_pad = jnp.zeros((1, COUT_PAD), jnp.float32).at[0, :cout].set(
        jnp.asarray(bias).astype(jnp.float32))
    return w_pad, b_pad


def conv2d_1x1(x_nchw, w_pad, b_pad):
    """x_nchw: [N, Cin, H, W]; w_pad: [Cin, 128] bf16; b_pad: [1, 128] f32
    -> [N, Cout, H, W] f32."""
    n, cin, h, w = x_nchw.shape
    cout = N_OUT
    m = n * h * w

    if h == 1 and w == 1:
        x2d = x_nchw.reshape(n, cin)                                       # pure reshape
    else:
        # TODO(synk): if this branch ever runs hot, fold the NCHW->NHWC layout
        # into a gridded BlockSpec instead of a wrapper-side transpose.
        x2d = jnp.transpose(x_nchw, (0, 2, 3, 1)).reshape(m, cin)

    flops = 2 * m * cin * COUT_PAD
    bytes_accessed = (m * cin * 4              # x (f32)
                      + cin * COUT_PAD * 2     # weight (bf16, padded)
                      + COUT_PAD * 4           # bias (f32, padded)
                      + m * COUT_PAD * 4)      # output (f32, padded)

    y_pad = pl.pallas_call(
        conv1x1_kernel,
        out_shape=jax.ShapeDtypeStruct((m, COUT_PAD), jnp.float32),
        cost_estimate=pl.CostEstimate(
            flops=flops, transcendentals=0, bytes_accessed=bytes_accessed),
        compiler_params=pltpu.CompilerParams(vmem_limit_bytes=2 * 1024 * 1024),
    )(x2d, w_pad, b_pad)

    y2d = y_pad[:, :cout]                                                  # drop lane padding

    if h == 1 and w == 1:
        return y2d.reshape(n, cout, 1, 1)                                  # pure reshape
    return y2d.reshape(n, h, w, cout).transpose(0, 3, 1, 2)


def init_params(key):
    # Deterministic init mimicking PyTorch Conv2d default (kaiming-uniform-ish).
    kw, kb = jax.random.split(key)
    fan_in = N_IN * 1 * 1
    bound = 1.0 / jnp.sqrt(fan_in)
    weight = jax.random.uniform(kw, (N_OUT, N_IN, 1, 1), jnp.float32, -bound, bound)
    bias = jax.random.uniform(kb, (N_OUT,), jnp.float32, -bound, bound)
    return weight, bias


if __name__ == "__main__":
    key = jax.random.PRNGKey(0)
    kx, kp = jax.random.split(key)

    # Input shape implied by the module: [1, 1248, 1, 1]
    x = jax.random.normal(kx, (1, N_IN, 1, 1), jnp.float32)
    weight, bias = init_params(kp)

    # One-time (init-time) weight/bias preparation -- amortized to zero per call.
    w_pad, b_pad = prepare_params(weight, bias)

    fwd = jax.jit(conv2d_1x1)
    y = fwd(x, w_pad, b_pad)
    y = jax.block_until_ready(y)

    # Reference in plain f32 JAX (same GEMM semantics). Tolerance covers the
    # bf16 weight/activation operands (accumulation is still f32).
    ref = (x.reshape(1, N_IN) @ weight.reshape(N_OUT, N_IN).T + bias).reshape(1, N_OUT, 1, 1)
    assert y.shape == (1, N_OUT, 1, 1)
    assert jnp.allclose(y, ref, atol=2e-2, rtol=2e-2)

    print("KERNEL_OK")
</pallas_src>

<mosaic_0001>
module attributes {stable_mosaic.version = 11 : i64} {
  func.func @conv1x1_kernel(%arg0: memref<1x1248xf32, #tpu.memory_space<vmem>>, %arg1: memref<1248x128xbf16, #tpu.memory_space<vmem>>, %arg2: memref<1x128xf32, #tpu.memory_space<vmem>>, %arg3: memref<1x128xf32, #tpu.memory_space<vmem>>) attributes {dimension_semantics = [], scalar_prefetch = 0 : i64, scratch_operands = 0 : i64, tpu.core_type = #tpu.core_type<tc>} {
    %c0 = arith.constant 0 : index
    %c0_0 = arith.constant 0 : index
    %0 = vector.load %arg0[%c0, %c0_0] : memref<1x1248xf32, #tpu.memory_space<vmem>>, vector<1x1248xf32>
    %1 = arith.truncf %0 : vector<1x1248xf32> to vector<1x1248xbf16>
    %c0_1 = arith.constant 0 : index
    %c0_2 = arith.constant 0 : index
    %2 = vector.load %arg1[%c0_1, %c0_2] : memref<1248x128xbf16, #tpu.memory_space<vmem>>, vector<1248x128xbf16>
    %cst = arith.constant dense<0.000000e+00> : vector<1x128xf32>
    %3 = tpu.matmul %1, %2, %cst {dimension_numbers = #tpu.dot_dimension_numbers<[1], [0], [0], [1], [0, 0, 1, 1], [], []>} : vector<1x1248xbf16>, vector<1248x128xbf16>, vector<1x128xf32> -> vector<1x128xf32>
    %c0_3 = arith.constant 0 : index
    %c0_4 = arith.constant 0 : index
    %4 = vector.load %arg2[%c0_3, %c0_4] : memref<1x128xf32, #tpu.memory_space<vmem>>, vector<1x128xf32>
    %5 = arith.addf %3, %4 : vector<1x128xf32>
    %c0_5 = arith.constant 0 : index
    %c0_6 = arith.constant 0 : index
    %6 = vector.load %arg3[%c0_5, %c0_6] : memref<1x128xf32, #tpu.memory_space<vmem>>, vector<1x128xf32>
    tpu.vector_store %arg3[%c0_5, %c0_6], %5 {strides = array<i32>} : memref<1x128xf32, #tpu.memory_space<vmem>>, vector<1x128xf32>,
    return
  }
}

</mosaic_0001>

<llo_original>
// kernel: conv2d_1x1.1
$region0: #{conv2d_1x1.1}
  #allocation0 [shape = 'u32[]', space=smem, size = 0x4, offset = 0x4, fixed_abs, tag = 'smem constant byte address 0x4 - core index']
  #allocation1 [shape = 'u32[144,128]{1,0:T(1,128)}', space=vmem, size = 0x12000, scoped, tag = 'internal scratch']
  %s0 = inlined_call_operand.hbm [shape: f32[1,1248], index: 0, kind: input, shape index: {}]
  %s1 = inlined_call_operand.hbm [shape: bf16[1248,128], index: 1, kind: input, shape index: {}]
  %s2 = inlined_call_operand.vmem [shape: f32[1,128], index: 2, kind: input, shape index: {}]
  %s3 = inlined_call_operand.vmem [shape: f32[1,128], index: 3, kind: output, shape index: {}]
  %s4 = sld [smem:[#allocation0]]
  $region30: #{conv2d_1x1.1} parent=0
    _
  %s6 = ssub.s32 1, %s4
  %s7 = scalar_select 0, %s6, %s4
  $region1: #{conv2d_1x1.1} parent=0
    #allocation2 [shape = 'u8[5120]{0}', space=vmem, size = 0x1400, scoped, tag = 'input window, operand 0, single buffered']
    #allocation3 [shape = 's32[1]{0}', space=sflag, size = 0x4, scoped, tag = 'scoped memory for conv2d_1x1.1']
    #allocation4 [shape = 'u8[319488]{0}', space=vmem, size = 0x4e000, scoped, tag = 'input window, operand 1, single buffered']
    #allocation5 [shape = 's32[1]{0}', space=sflag, size = 0x4, scoped, tag = 'scoped memory for conv2d_1x1.1']
    %8 = vsyncpa [#allocation3], 0
    %9 = vsyncpa [#allocation5], 0
    // Predicated region
    $region2: #{conv2d_1x1.1} parent=1 // pred_check
      _
    $region3: #{conv2d_1x1.1} parent=1 // pred_check_branch
      %11 = sbr.rel (0) target = $region5
    $region4: #{conv2d_1x1.1} parent=1 // pred_region
      %s13 = ssub.s32 160, 160
      %14 = vsyncadd [#allocation3], %s13
      %s16 = sshll.u32 [#allocation2], 4
      %s17 = int_to_ptr.vmem [resolvable:$true] %s16
      %19 = dma.hbm_to_vmem [thread:$0]  %s0, 160, %s17, [#allocation3]
    $region5: #{conv2d_1x1.1} parent=1 // pred_fallthru
      _
    // Predicated region
    $region6: #{conv2d_1x1.1} parent=1 // pred_check
      _
    $region7: #{conv2d_1x1.1} parent=1 // pred_check_branch
      %21 = sbr.rel (0) target = $region9
    $region8: #{conv2d_1x1.1} parent=1 // pred_region
      %s23 = ssub.s32 9984, 9984
      %24 = vsyncadd [#allocation5], %s23
      %s25 = sshll.u32 [#allocation4], 4
      %s26 = int_to_ptr.vmem [resolvable:$true] %s25
      %31 = dma.hbm_to_vmem [thread:$0]  %s1, 9984, %s26, [#allocation5], 64, 64, 4
    $region9: #{conv2d_1x1.1} parent=1 // pred_fallthru
      _
    // Predicated region
    $region10: #{conv2d_1x1.1} parent=1 // pred_check
      _
    $region11: #{conv2d_1x1.1} parent=1 // pred_check_branch
      %33 = sbr.rel (0) target = $region13
    $region12: #{conv2d_1x1.1} parent=1 // pred_region
      _
    $region13: #{conv2d_1x1.1} parent=1 // pred_fallthru
      _
    // Predicated region
    $region14: #{conv2d_1x1.1} parent=1 // pred_check
      _
    $region15: #{conv2d_1x1.1} parent=1 // pred_check_branch
      %35 = sbr.rel (0) target = $region17
    $region16: #{conv2d_1x1.1} parent=1 // pred_region
      %36 = dma.done [#allocation3], 160
    $region17: #{conv2d_1x1.1} parent=1 // pred_fallthru
      _
    // Predicated region
    $region18: #{conv2d_1x1.1} parent=1 // pred_check
      _
    $region19: #{conv2d_1x1.1} parent=1 // pred_check_branch
      %38 = sbr.rel (0) target = $region21
    $region20: #{conv2d_1x1.1} parent=1 // pred_region
      %39 = dma.done [#allocation5], 9984
    $region21: #{conv2d_1x1.1} parent=1 // pred_fallthru
      _
    %v41 = vld [vmem:[#allocation2] sm:$0xff]
    %v42 = vld [vmem:[#allocation2 + $0x8] sm:$0x3]
    %v45 = vlaneseq
    %v46 = vshrl.u32 %v45, 7
    %v47 = vsub.s32 0, %v46
    %v48 = vrot.slane %v41, %v47
    %v49 = vlaneseq
    %v50 = vshrl.u32 %v49, 7
    %v51 = vsub.s32 1, %v50
    %v52 = vrot.slane %v41, %v51
    %v53 = vlaneseq
    %v54 = vshrl.u32 %v53, 7
    %v55 = vsub.s32 2, %v54
    %v56 = vrot.slane %v41, %v55
    %v57 = vlaneseq
    %v58 = vshrl.u32 %v57, 7
    %v59 = vsub.s32 3, %v58
    %v60 = vrot.slane %v41, %v59
    %v61 = vlaneseq
    %v62 = vshrl.u32 %v61, 7
    %v63 = vsub.s32 4, %v62
    %v64 = vrot.slane %v41, %v63
    %v65 = vlaneseq
    %v66 = vshrl.u32 %v65, 7
    %v67 = vsub.s32 5, %v66
    %v68 = vrot.slane %v41, %v67
    %v69 = vlaneseq
    %v70 = vshrl.u32 %v69, 7
    %v71 = vsub.s32 6, %v70
    %v72 = vrot.slane %v41, %v71
    %v73 = vlaneseq
    %v74 = vshrl.u32 %v73, 7
    %v75 = vsub.s32 7, %v74
    %v76 = vrot.slane %v41, %v75
    %v77 = vlaneseq
    %v78 = vshrl.u32 %v77, 7
    %v79 = vsub.s32 0, %v78
    %v80 = vrot.slane %v42, %v79
    %v81 = vlaneseq
    %v82 = vshrl.u32 %v81, 7
    %v83 = vsub.s32 1, %v82
    %v84 = vrot.slane %v42, %v83
    %v95 = vpack.c.bf16 %v48, %v48
    %v96 = vpack.c.bf16 %v52, %v52
    %v97 = vpack.c.bf16 %v56, %v56
    %v98 = vpack.c.bf16 %v60, %v60
    %v99 = vpack.c.bf16 %v64, %v64
    %v100 = vpack.c.bf16 %v68, %v68
    %v101 = vpack.c.bf16 %v72, %v72
    %v102 = vpack.c.bf16 %v76, %v76
    %v103 = vpack.c.bf16 %v80, %v80
    %v104 = vpack.c.bf16 %v84, %v84
    %v105 = vld [vmem:[#allocation4] sm:$0xf]
    %v106 = vld [vmem:[#allocation4 + $0x4] sm:$0xf]
    %v107 = vld [vmem:[#allocation4 + $0x8] sm:$0xf]
    %v108 = vld [vmem:[#allocation4 + $0xc] sm:$0xf]
    %v109 = vld [vmem:[#allocation4 + $0x10] sm:$0xf]
    %v110 = vld [vmem:[#allocation4 + $0x14] sm:$0xf]
    %v111 = vld [vmem:[#allocation4 + $0x18] sm:$0xf]
    %v112 = vld [vmem:[#allocation4 + $0x1c] sm:$0xf]
    %v113 = vld [vmem:[#allocation4 + $0x20] sm:$0xf]
    %v114 = vld [vmem:[#allocation4 + $0x24] sm:$0xf]
    %v115 = vld [vmem:[#allocation4 + $0x28] sm:$0xf]
    %v116 = vld [vmem:[#allocation4 + $0x2c] sm:$0xf]
    %v117 = vld [vmem:[#allocation4 + $0x30] sm:$0xf]
    %v118 = vld [vmem:[#allocation4 + $0x34] sm:$0xf]
    %v119 = vld [vmem:[#allocation4 + $0x38] sm:$0xf]
    %v120 = vld [vmem:[#allocation4 + $0x3c] sm:$0xf]
    %v121 = vld [vmem:[#allocation4 + $0x40] sm:$0xf]
    %v122 = vld [vmem:[#allocation4 + $0x44] sm:$0xf]
    %v123 = vld [vmem:[#allocation4 + $0x48] sm:$0xf]
    %v124 = vld [vmem:[#allocation4 + $0x4c] sm:$0xf]
    %v125 = vld [vmem:[#allocation4 + $0x50] sm:$0xf]
    %v126 = vld [vmem:[#allocation4 + $0x54] sm:$0xf]
    %v127 = vld [vmem:[#allocation4 + $0x58] sm:$0xf]
    %v128 = vld [vmem:[#allocation4 + $0x5c] sm:$0xf]
    %v129 = vld [vmem:[#allocation4 + $0x60] sm:$0xf]
    %v130 = vld [vmem:[#allocation4 + $0x64] sm:$0xf]
    %v131 = vld [vmem:[#allocation4 + $0x68] sm:$0xf]
    %v132 = vld [vmem:[#allocation4 + $0x6c] sm:$0xf]
    %v133 = vld [vmem:[#allocation4 + $0x70] sm:$0xf]
    %v134 = vld [vmem:[#allocation4 + $0x74] sm:$0xf]
    %v135 = vld [vmem:[#allocation4 + $0x78] sm:$0xf]
    %v136 = vld [vmem:[#allocation4 + $0x7c] sm:$0xf]
    %v137 = vld [vmem:[#allocation4 + $0x80] sm:$0xf]
    %v138 = vld [vmem:[#allocation4 + $0x84] sm:$0xf]
    %v139 = vld [vmem:[#allocation4 + $0x88] sm:$0xf]
    %v140 = vld [vmem:[#allocation4 + $0x8c] sm:$0xf]
    %v141 = vld [vmem:[#allocation4 + $0x90] sm:$0xf]
    %v142 = vld [vmem:[#allocation4 + $0x94] sm:$0xf]
    %v143 = vld [vmem:[#allocation4 + $0x98] sm:$0xf]
    %v144 = vld [vmem:[#allocation4 + $0x9c] sm:$0xf]
    %v145 = vld [vmem:[#allocation4 + $0xa0] sm:$0xf]
    %v146 = vld [vmem:[#allocation4 + $0xa4] sm:$0xf]
    %v147 = vld [vmem:[#allocation4 + $0xa8] sm:$0xf]
    %v148 = vld [vmem:[#allocation4 + $0xac] sm:$0xf]
    %v149 = vld [vmem:[#allocation4 + $0xb0] sm:$0xf]
    %v150 = vld [vmem:[#allocation4 + $0xb4] sm:$0xf]
    %v151 = vld [vmem:[#allocation4 + $0xb8] sm:$0xf]
    %v152 = vld [vmem:[#allocation4 + $0xbc] sm:$0xf]
    %v153 = vld [vmem:[#allocation4 + $0xc0] sm:$0xf]
    %v154 = vld [vmem:[#allocation4 + $0xc4] sm:$0xf]
    %v155 = vld [vmem:[#allocation4 + $0xc8] sm:$0xf]
    %v156 = vld [vmem:[#allocation4 + $0xcc] sm:$0xf]
    %v157 = vld [vmem:[#allocation4 + $0xd0] sm:$0xf]
    %v158 = vld [vmem:[#allocation4 + $0xd4] sm:$0xf]
    %v159 = vld [vmem:[#allocation4 + $0xd8] sm:$0xf]
    %v160 = vld [vmem:[#allocation4 + $0xdc] sm:$0xf]
    %v161 = vld [vmem:[#allocation4 + $0xe0] sm:$0xf]
    %v162 = vld [vmem:[#allocation4 + $0xe4] sm:$0xf]
    %v163 = vld [vmem:[#allocation4 + $0xe8] sm:$0xf]
    %v164 = vld [vmem:[#allocation4 + $0xec] sm:$0xf]
    %v165 = vld [vmem:[#allocation4 + $0xf0] sm:$0xf]
    %v166 = vld [vmem:[#allocation4 + $0xf4] sm:$0xf]
    %v167 = vld [vmem:[#allocation4 + $0xf8] sm:$0xf]
    %v168 = vld [vmem:[#allocation4 + $0xfc] sm:$0xf]
    %v169 = vld [vmem:[#allocation4 + $0x100] sm:$0xf]
    %v170 = vld [vmem:[#allocation4 + $0x104] sm:$0xf]
    %v171 = vld [vmem:[#allocation4 + $0x108] sm:$0xf]
    %v172 = vld [vmem:[#allocation4 + $0x10c] sm:$0xf]
    %v173 = vld [vmem:[#allocation4 + $0x110] sm:$0xf]
    %v174 = vld [vmem:[#allocation4 + $0x114] sm:$0xf]
    %v175 = vld [vmem:[#allocation4 + $0x118] sm:$0xf]
    %v176 = vld [vmem:[#allocation4 + $0x11c] sm:$0xf]
    %v177 = vld [vmem:[#allocation4 + $0x120] sm:$0xf]
    %v178 = vld [vmem:[#allocation4 + $0x124] sm:$0xf]
    %v179 = vld [vmem:[#allocation4 + $0x128] sm:$0xf]
    %v180 = vld [vmem:[#allocation4 + $0x12c] sm:$0xf]
    %v181 = vld [vmem:[#allocation4 + $0x130] sm:$0xf]
    %v182 = vld [vmem:[#allocation4 + $0x134] sm:$0xf]
    %v183 = vld [vmem:[#allocation4 + $0x138] sm:$0xf]
    %v184 = vld [vmem:[#allocation4 + $0x13c] sm:$0xf]
    %v185 = vld [vmem:[#allocation4 + $0x140] sm:$0xf]
    %v186 = vld [vmem:[#allocation4 + $0x144] sm:$0xf]
    %v187 = vld [vmem:[#allocation4 + $0x148] sm:$0xf]
    %v188 = vld [vmem:[#allocation4 + $0x14c] sm:$0xf]
    %v189 = vld [vmem:[#allocation4 + $0x150] sm:$0xf]
    %v190 = vld [vmem:[#allocation4 + $0x154] sm:$0xf]
    %v191 = vld [vmem:[#allocation4 + $0x158] sm:$0xf]
    %v192 = vld [vmem:[#allocation4 + $0x15c] sm:$0xf]
    %v193 = vld [vmem:[#allocation4 + $0x160] sm:$0xf]
    %v194 = vld [vmem:[#allocation4 + $0x164] sm:$0xf]
    %v195 = vld [vmem:[#allocation4 + $0x168] sm:$0xf]
    %v196 = vld [vmem:[#allocation4 + $0x16c] sm:$0xf]
    %v197 = vld [vmem:[#allocation4 + $0x170] sm:$0xf]
    %v198 = vld [vmem:[#allocation4 + $0x174] sm:$0xf]
    %v199 = vld [vmem:[#allocation4 + $0x178] sm:$0xf]
    %v200 = vld [vmem:[#allocation4 + $0x17c] sm:$0xf]
    %v201 = vld [vmem:[#allocation4 + $0x180] sm:$0xf]
    %v202 = vld [vmem:[#allocation4 + $0x184] sm:$0xf]
    %v203 = vld [vmem:[#allocation4 + $0x188] sm:$0xf]
    %v204 = vld [vmem:[#allocation4 + $0x18c] sm:$0xf]
    %v205 = vld [vmem:[#allocation4 + $0x190] sm:$0xf]
    %v206 = vld [vmem:[#allocation4 + $0x194] sm:$0xf]
    %v207 = vld [vmem:[#allocation4 + $0x198] sm:$0xf]
    %v208 = vld [vmem:[#allocation4 + $0x19c] sm:$0xf]
    %v209 = vld [vmem:[#allocation4 + $0x1a0] sm:$0xf]
    %v210 = vld [vmem:[#allocation4 + $0x1a4] sm:$0xf]
    %v211 = vld [vmem:[#allocation4 + $0x1a8] sm:$0xf]
    %v212 = vld [vmem:[#allocation4 + $0x1ac] sm:$0xf]
    %v213 = vld [vmem:[#allocation4 + $0x1b0] sm:$0xf]
    %v214 = vld [vmem:[#allocation4 + $0x1b4] sm:$0xf]
    %v215 = vld [vmem:[#allocation4 + $0x1b8] sm:$0xf]
    %v216 = vld [vmem:[#allocation4 + $0x1bc] sm:$0xf]
    %v217 = vld [vmem:[#allocation4 + $0x1c0] sm:$0xf]
    %v218 = vld [vmem:[#allocation4 + $0x1c4] sm:$0xf]
    %v219 = vld [vmem:[#allocation4 + $0x1c8] sm:$0xf]
    %v220 = vld [vmem:[#allocation4 + $0x1cc] sm:$0xf]
    %v221 = vld [vmem:[#allocation4 + $0x1d0] sm:$0xf]
    %v222 = vld [vmem:[#allocation4 + $0x1d4] sm:$0xf]
    %v223 = vld [vmem:[#allocation4 + $0x1d8] sm:$0xf]
    %v224 = vld [vmem:[#allocation4 + $0x1dc] sm:$0xf]
    %v225 = vld [vmem:[#allocation4 + $0x1e0] sm:$0xf]
    %v226 = vld [vmem:[#allocation4 + $0x1e4] sm:$0xf]
    %v227 = vld [vmem:[#allocation4 + $0x1e8] sm:$0xf]
    %v228 = vld [vmem:[#allocation4 + $0x1ec] sm:$0xf]
    %v229 = vld [vmem:[#allocation4 + $0x1f0] sm:$0xf]
    %v230 = vld [vmem:[#allocation4 + $0x1f4] sm:$0xf]
    %v231 = vld [vmem:[#allocation4 + $0x1f8] sm:$0xf]
    %v232 = vld [vmem:[#allocation4 + $0x1fc] sm:$0xf]
    %v233 = vld [vmem:[#allocation4 + $0x200] sm:$0xf]
    %v234 = vld [vmem:[#allocation4 + $0x204] sm:$0xf]
    %v235 = vld [vmem:[#allocation4 + $0x208] sm:$0xf]
    %v236 = vld [vmem:[#allocation4 + $0x20c] sm:$0xf]
    %v237 = vld [vmem:[#allocation4 + $0x210] sm:$0xf]
    %v238 = vld [vmem:[#allocation4 + $0x214] sm:$0xf]
    %v239 = vld [vmem:[#allocation4 + $0x218] sm:$0xf]
    %v240 = vld [vmem:[#allocation4 + $0x21c] sm:$0xf]
    %v241 = vld [vmem:[#allocation4 + $0x220] sm:$0xf]
    %v242 = vld [vmem:[#allocation4 + $0x224] sm:$0xf]
    %v243 = vld [vmem:[#allocation4 + $0x228] sm:$0xf]
    %v244 = vld [vmem:[#allocation4 + $0x22c] sm:$0xf]
    %v245 = vld [vmem:[#allocation4 + $0x230] sm:$0xf]
    %v246 = vld [vmem:[#allocation4 + $0x234] sm:$0xf]
    %v247 = vld [vmem:[#allocation4 + $0x238] sm:$0xf]
    %v248 = vld [vmem:[#allocation4 + $0x23c] sm:$0xf]
    %v249 = vld [vmem:[#allocation4 + $0x240] sm:$0xf]
    %v250 = vld [vmem:[#allocation4 + $0x244] sm:$0xf]
    %v251 = vld [vmem:[#allocation4 + $0x248] sm:$0xf]
    %v252 = vld [vmem:[#allocation4 + $0x24c] sm:$0xf]
    %v253 = vld [vmem:[#allocation4 + $0x250] sm:$0xf]
    %v254 = vld [vmem:[#allocation4 + $0x254] sm:$0xf]
    %v255 = vld [vmem:[#allocation4 + $0x258] sm:$0xf]
    %v256 = vld [vmem:[#allocation4 + $0x25c] sm:$0xf]
    %v257 = vld [vmem:[#allocation4 + $0x260] sm:$0xf]
    %v258 = vld [vmem:[#allocation4 + $0x264] sm:$0xf]
    %v259 = vld [vmem:[#allocation4 + $0x268] sm:$0xf]
    %v260 = vld [vmem:[#allocation4 + $0x26c] sm:$0xf]
    %v261 = vld [vmem:[%s2] sm:$0x1]
    %v418 = vunpack.c.l.b16 %v105
    %v419 = vunpack.c.l.b16 %v106
    %v420 = vunpack.c.l.b16 %v107
    %v421 = vunpack.c.l.b16 %v108
    %v422 = vunpack.c.l.b16 %v109
    %v423 = vunpack.c.l.b16 %v110
    %v424 = vunpack.c.l.b16 %v111
    %v425 = vunpack.c.l.b16 %v112
    %v426 = vunpack.c.l.b16 %v113
    %v427 = vunpack.c.l.b16 %v114
    %v428 = vunpack.c.l.b16 %v115
    %v429 = vunpack.c.l.b16 %v116
    %v430 = vunpack.c.l.b16 %v117
    %v431 = vunpack.c.l.b16 %v118
    %v432 = vunpack.c.l.b16 %v119
    %v433 = vunpack.c.l.b16 %v120
    %v434 = vunpack.c.l.b16 %v121
    %v435 = vunpack.c.l.b16 %v122
    %v436 = vunpack.c.l.b16 %v123
    %v437 = vunpack.c.l.b16 %v124
    %v438 = vunpack.c.l.b16 %v125
    %v439 = vunpack.c.l.b16 %v126
    %v440 = vunpack.c.l.b16 %v127
    %v441 = vunpack.c.l.b16 %v128
    %v442 = vunpack.c.l.b16 %v129
    %v443 = vunpack.c.l.b16 %v130
    %v444 = vunpack.c.l.b16 %v131
    %v445 = vunpack.c.l.b16 %v132
    %v446 = vunpack.c.l.b16 %v133
    %v447 = vunpack.c.l.b16 %v134
    %v448 = vunpack.c.l.b16 %v135
    %v449 = vunpack.c.l.b16 %v136
    %v450 = vunpack.c.l.b16 %v137
    %v451 = vunpack.c.l.b16 %v138
    %v452 = vunpack.c.l.b16 %v139
    %v453 = vunpack.c.l.b16 %v140
    %v454 = vunpack.c.l.b16 %v141
    %v455 = vunpack.c.l.b16 %v142
    %v456 = vunpack.c.l.b16 %v143
    %v457 = vunpack.c.l.b16 %v144
    %v458 = vunpack.c.l.b16 %v145
    %v459 = vunpack.c.l.b16 %v146
    %v460 = vunpack.c.l.b16 %v147
    %v461 = vunpack.c.l.b16 %v148
    %v462 = vunpack.c.l.b16 %v149
    %v463 = vunpack.c.l.b16 %v150
    %v464 = vunpack.c.l.b16 %v151
    %v465 = vunpack.c.l.b16 %v152
    %v466 = vunpack.c.l.b16 %v153
    %v467 = vunpack.c.l.b16 %v154
    %v468 = vunpack.c.l.b16 %v155
    %v469 = vunpack.c.l.b16 %v156
    %v470 = vunpack.c.l.b16 %v157
    %v471 = vunpack.c.l.b16 %v158
    %v472 = vunpack.c.l.b16 %v159
    %v473 = vunpack.c.l.b16 %v160
    %v474 = vunpack.c.l.b16 %v161
    %v475 = vunpack.c.l.b16 %v162
    %v476 = vunpack.c.l.b16 %v163
    %v477 = vunpack.c.l.b16 %v164
    %v478 = vunpack.c.l.b16 %v165
    %v479 = vunpack.c.l.b16 %v166
    %v480 = vunpack.c.l.b16 %v167
    %v481 = vunpack.c.l.b16 %v168
    %v482 = vunpack.c.l.b16 %v169
    %v483 = vunpack.c.l.b16 %v170
    %v484 = vunpack.c.l.b16 %v171
    %v485 = vunpack.c.l.b16 %v172
    %v486 = vunpack.c.l.b16 %v173
    %v487 = vunpack.c.l.b16 %v174
    %v488 = vunpack.c.l.b16 %v175
    %v489 = vunpack.c.l.b16 %v176
    %v490 = vunpack.c.l.b16 %v177
    %v491 = vunpack.c.l.b16 %v178
    %v492 = vunpack.c.l.b16 %v179
    %v493 = vunpack.c.l.b16 %v180
    %v494 = vunpack.c.l.b16 %v181
    %v495 = vunpack.c.l.b16 %v182
    %v496 = vunpack.c.l.b16 %v183
    %v497 = vunpack.c.l.b16 %v184
    %v498 = vunpack.c.l.b16 %v185
    %v499 = vunpack.c.l.b16 %v186
    %v500 = vunpack.c.l.b16 %v187
    %v501 = vunpack.c.l.b16 %v188
    %v502 = vunpack.c.l.b16 %v189
    %v503 = vunpack.c.l.b16 %v190
    %v504 = vunpack.c.l.b16 %v191
    %v505 = vunpack.c.l.b16 %v192
    %v506 = vunpack.c.l.b16 %v193
    %v507 = vunpack.c.l.b16 %v194
    %v508 = vunpack.c.l.b16 %v195
    %v509 = vunpack.c.l.b16 %v196
    %v510 = vunpack.c.l.b16 %v197
    %v511 = vunpack.c.l.b16 %v198
    %v512 = vunpack.c.l.b16 %v199
    %v513 = vunpack.c.l.b16 %v200
    %v514 = vunpack.c.l.b16 %v201
    %v515 = vunpack.c.l.b16 %v202
    %v516 = vunpack.c.l.b16 %v203
    %v517 = vunpack.c.l.b16 %v204
    %v518 = vunpack.c.l.b16 %v205
    %v519 = vunpack.c.l.b16 %v206
    %v520 = vunpack.c.l.b16 %v207
    %v521 = vunpack.c.l.b16 %v208
    %v522 = vunpack.c.l.b16 %v209
    %v523 = vunpack.c.l.b16 %v210
    %v524 = vunpack.c.l.b16 %v211
    %v525 = vunpack.c.l.b16 %v212
    %v526 = vunpack.c.l.b16 %v213
    %v527 = vunpack.c.l.b16 %v214
    %v528 = vunpack.c.l.b16 %v215
    %v529 = vunpack.c.l.b16 %v216
    %v530 = vunpack.c.l.b16 %v217
    %v531 = vunpack.c.l.b16 %v218
    %v532 = vunpack.c.l.b16 %v219
    %v533 = vunpack.c.l.b16 %v220
    %v534 = vunpack.c.l.b16 %v221
    %v535 = vunpack.c.l.b16 %v222
    %v536 = vunpack.c.l.b16 %v223
    %v537 = vunpack.c.l.b16 %v224
    %v538 = vunpack.c.l.b16 %v225
    %v539 = vunpack.c.l.b16 %v226
    %v540 = vunpack.c.l.b16 %v227
    %v541 = vunpack.c.l.b16 %v228
    %v542 = vunpack.c.l.b16 %v229
    %v543 = vunpack.c.l.b16 %v230
    %v544 = vunpack.c.l.b16 %v231
    %v545 = vunpack.c.l.b16 %v232
    %v546 = vunpack.c.l.b16 %v233
    %v547 = vunpack.c.l.b16 %v234
    %v548 = vunpack.c.l.b16 %v235
    %v549 = vunpack.c.l.b16 %v236
    %v550 = vunpack.c.l.b16 %v237
    %v551 = vunpack.c.l.b16 %v238
    %v552 = vunpack.c.l.b16 %v239
    %v553 = vunpack.c.l.b16 %v240
    %v554 = vunpack.c.l.b16 %v241
    %v555 = vunpack.c.l.b16 %v242
    %v556 = vunpack.c.l.b16 %v243
    %v557 = vunpack.c.l.b16 %v244
    %v558 = vunpack.c.l.b16 %v245
    %v559 = vunpack.c.l.b16 %v246
    %v560 = vunpack.c.l.b16 %v247
    %v561 = vunpack.c.l.b16 %v248
    %v562 = vunpack.c.l.b16 %v249
    %v563 = vunpack.c.l.b16 %v250
    %v564 = vunpack.c.l.b16 %v251
    %v565 = vunpack.c.l.b16 %v252
    %v566 = vunpack.c.l.b16 %v253
    %v567 = vunpack.c.l.b16 %v254
    %v568 = vunpack.c.l.b16 %v255
    %v569 = vunpack.c.l.b16 %v256
    %v570 = vunpack.c.l.b16 %v257
    %v571 = vunpack.c.l.b16 %v258
    %v572 = vunpack.c.l.b16 %v259
    %v573 = vunpack.c.l.b16 %v260
    %v574 = vpack.c.b16 %v419, %v418
    %v575 = vpack.c.b16 %v421, %v420
    %v576 = vpack.c.b16 %v423, %v422
    %v577 = vpack.c.b16 %v425, %v424
    %v578 = vpack.c.b16 %v427, %v426
    %v579 = vpack.c.b16 %v429, %v428
    %v580 = vpack.c.b16 %v431, %v430
    %v581 = vpack.c.b16 %v433, %v432
    %v582 = vpack.c.b16 %v435, %v434
    %v583 = vpack.c.b16 %v437, %v436
    %v584 = vpack.c.b16 %v439, %v438
    %v585 = vpack.c.b16 %v441, %v440
    %v586 = vpack.c.b16 %v443, %v442
    %v587 = vpack.c.b16 %v445, %v444
    %v588 = vpack.c.b16 %v447, %v446
    %v589 = vpack.c.b16 %v449, %v448
    %v590 = vpack.c.b16 %v451, %v450
    %v591 = vpack.c.b16 %v453, %v452
    %v592 = vpack.c.b16 %v455, %v454
    %v593 = vpack.c.b16 %v457, %v456
    %v594 = vpack.c.b16 %v459, %v458
    %v595 = vpack.c.b16 %v461, %v460
    %v596 = vpack.c.b16 %v463, %v462
    %v597 = vpack.c.b16 %v465, %v464
    %v598 = vpack.c.b16 %v467, %v466
    %v599 = vpack.c.b16 %v469, %v468
    %v600 = vpack.c.b16 %v471, %v470
    %v601 = vpack.c.b16 %v473, %v472
    %v602 = vpack.c.b16 %v475, %v474
    %v603 = vpack.c.b16 %v477, %v476
    %v604 = vpack.c.b16 %v479, %v478
    %v605 = vpack.c.b16 %v481, %v480
    %v606 = vpack.c.b16 %v483, %v482
    %v607 = vpack.c.b16 %v485, %v484
    %v608 = vpack.c.b16 %v487, %v486
    %v609 = vpack.c.b16 %v489, %v488
    %v610 = vpack.c.b16 %v491, %v490
    %v611 = vpack.c.b16 %v493, %v492
    %v612 = vpack.c.b16 %v495, %v494
    %v613 = vpack.c.b16 %v497, %v496
    %v614 = vpack.c.b16 %v499, %v498
    %v615 = vpack.c.b16 %v501, %v500
    %v616 = vpack.c.b16 %v503, %v502
    %v617 = vpack.c.b16 %v505, %v504
    %v618 = vpack.c.b16 %v507, %v506
    %v619 = vpack.c.b16 %v509, %v508
    %v620 = vpack.c.b16 %v511, %v510
    %v621 = vpack.c.b16 %v513, %v512
    %v622 = vpack.c.b16 %v515, %v514
    %v623 = vpack.c.b16 %v517, %v516
    %v624 = vpack.c.b16 %v519, %v518
    %v625 = vpack.c.b16 %v521, %v520
    %v626 = vpack.c.b16 %v523, %v522
    %v627 = vpack.c.b16 %v525, %v524
    %v628 = vpack.c.b16 %v527, %v526
    %v629 = vpack.c.b16 %v529, %v528
    %v630 = vpack.c.b16 %v531, %v530
    %v631 = vpack.c.b16 %v533, %v532
    %v632 = vpack.c.b16 %v535, %v534
    %v633 = vpack.c.b16 %v537, %v536
    %v634 = vpack.c.b16 %v539, %v538
    %v635 = vpack.c.b16 %v541, %v540
    %v636 = vpack.c.b16 %v543, %v542
    %v637 = vpack.c.b16 %v545, %v544
    %v638 = vpack.c.b16 %v547, %v546
    %v639 = vpack.c.b16 %v549, %v548
    %v640 = vpack.c.b16 %v551, %v550
    %v641 = vpack.c.b16 %v553, %v552
    %v642 = vpack.c.b16 %v555, %v554
    %v643 = vpack.c.b16 %v557, %v556
    %v644 = vpack.c.b16 %v559, %v558
    %v645 = vpack.c.b16 %v561, %v560
    %v646 = vpack.c.b16 %v563, %v562
    %v647 = vpack.c.b16 %v565, %v564
    %v648 = vpack.c.b16 %v567, %v566
    %v649 = vpack.c.b16 %v569, %v568
    %v650 = vpack.c.b16 %v571, %v570
    %v651 = vpack.c.b16 %v573, %v572
    %vm730 = vcmask 785408
    %v732 = vsel %vm730, %v104, 0
    %734 = vmatprep.subr.bf16.mxu0 0
    %735 = vmatpush1.bf16.msra.mxu0 %v574
    %736 = vmatprep.subr.bf16.mxu0 0
    %737 = vmatpush1.bf16.msra.mxu0 %v575
    %738 = vmatprep.subr.bf16.mxu0 0
    %739 = vmatpush1.bf16.msra.mxu0 %v576
    %740 = vmatprep.subr.bf16.mxu0 0
    %741 = vmatpush1.bf16.msra.mxu0 %v577
    %742 = vmatprep.subr.bf16.mxu0 0
    %743 = vmatpush1.bf16.msra.mxu0 %v578
    %744 = vmatprep.subr.bf16.mxu0 0
    %745 = vmatpush1.bf16.msra.mxu0 %v579
    %746 = vmatprep.subr.bf16.mxu0 0
    %747 = vmatpush1.bf16.msra.mxu0 %v580
    %748 = vmatprep.subr.bf16.mxu0 0
    %749 = vmatpush1.bf16.msra.mxu0 %v581
    %750 = vmatprep.subr.bf16.mxu0 0
    %751 = vmatpush1.bf16.msra.mxu0 %v582
    %752 = vmatprep.subr.bf16.mxu0 0
    %753 = vmatpush1.bf16.msra.mxu0 %v583
    %754 = vmatprep.subr.bf16.mxu0 0
    %755 = vmatpush1.bf16.msra.mxu0 %v584
    %756 = vmatprep.subr.bf16.mxu0 0
    %757 = vmatpush1.bf16.msra.mxu0 %v585
    %758 = vmatprep.subr.bf16.mxu0 0
    %759 = vmatpush1.bf16.msra.mxu0 %v586
    %760 = vmatprep.subr.bf16.mxu0 0
    %761 = vmatpush1.bf16.msra.mxu0 %v587
    %762 = vmatprep.subr.bf16.mxu0 0
    %763 = vmatpush1.bf16.msra.mxu0 %v588
    %764 = vmatprep.subr.bf16.mxu0 0
    %765 = vmatpush1.bf16.msra.mxu0 %v589
    %766 = vmatprep.mubr.bf16.mxu0 %v96
    %767 = vmatmul.mubr.bf16.gmra.mrb[0].mxu0 %v95
    %v768 = vpop.f32.mrb[0].mxu0
    %v769 = vadd.f32 %v261, %v768
    %v770 = vpop.f32.mrb[0].mxu0
    %v771 = vpop.f32.mrb[0].mxu0
    %v772 = vpop.f32.mrb[0].mxu0
    %773 = vdwg.mxu0
    %774 = vmatprep.subr.bf16.mxu0 0
    %775 = vmatpush1.bf16.msra.mxu0 %v590
    %776 = vmatprep.subr.bf16.mxu0 0
    %777 = vmatpush1.bf16.msra.mxu0 %v591
    %778 = vmatprep.subr.bf16.mxu0 0
    %779 = vmatpush1.bf16.msra.mxu0 %v592
    %780 = vmatprep.subr.bf16.mxu0 0
    %781 = vmatpush1.bf16.msra.mxu0 %v593
    %782 = vmatprep.subr.bf16.mxu0 0
    %783 = vmatpush1.bf16.msra.mxu0 %v594
    %784 = vmatprep.subr.bf16.mxu0 0
    %785 = vmatpush1.bf16.msra.mxu0 %v595
    %786 = vmatprep.subr.bf16.mxu0 0
    %787 = vmatpush1.bf16.msra.mxu0 %v596
    %788 = vmatprep.subr.bf16.mxu0 0
    %789 = vmatpush1.bf16.msra.mxu0 %v597
    %790 = vmatprep.subr.bf16.mxu0 0
    %791 = vmatpush1.bf16.msra.mxu0 %v598
    %792 = vmatprep.subr.bf16.mxu0 0
    %793 = vmatpush1.bf16.msra.mxu0 %v599
    %794 = vmatprep.subr.bf16.mxu0 0
    %795 = vmatpush1.bf16.msra.mxu0 %v600
    %796 = vmatprep.subr.bf16.mxu0 0
    %797 = vmatpush1.bf16.msra.mxu0 %v601
    %798 = vmatprep.subr.bf16.mxu0 0
    %799 = vmatpush1.bf16.msra.mxu0 %v602
    %800 = vmatprep.subr.bf16.mxu0 0
    %801 = vmatpush1.bf16.msra.mxu0 %v603
    %802 = vmatprep.subr.bf16.mxu0 0
    %803 = vmatpush1.bf16.msra.mxu0 %v604
    %804 = vmatprep.subr.bf16.mxu0 0
    %805 = vmatpush1.bf16.msra.mxu0 %v605
    %806 = vmatprep.mubr.bf16.mxu0 %v98
    %807 = vmatmul.mubr.bf16.gmra.mrb[0].mxu0 %v97
    %v808 = vpop.f32.mrb[0].mxu0
    %v809 = vadd.f32 %v769, %v808
    %v810 = vpop.f32.mrb[0].mxu0
    %v811 = vpop.f32.mrb[0].mxu0
    %v812 = vpop.f32.mrb[0].mxu0
    %813 = vdwg.mxu0
    %814 = vmatprep.subr.bf16.mxu0 0
    %815 = vmatpush1.bf16.msra.mxu0 %v606
    %816 = vmatprep.subr.bf16.mxu0 0
    %817 = vmatpush1.bf16.msra.mxu0 %v607
    %818 = vmatprep.subr.bf16.mxu0 0
    %819 = vmatpush1.bf16.msra.mxu0 %v608
    %820 = vmatprep.subr.bf16.mxu0 0
    %821 = vmatpush1.bf16.msra.mxu0 %v609
    %822 = vmatprep.subr.bf16.mxu0 0
    %823 = vmatpush1.bf16.msra.mxu0 %v610
    %824 = vmatprep.subr.bf16.mxu0 0
    %825 = vmatpush1.bf16.msra.mxu0 %v611
    %826 = vmatprep.subr.bf16.mxu0 0
    %827 = vmatpush1.bf16.msra.mxu0 %v612
    %828 = vmatprep.subr.bf16.mxu0 0
    %829 = vmatpush1.bf16.msra.mxu0 %v613
    %830 = vmatprep.subr.bf16.mxu0 0
    %831 = vmatpush1.bf16.msra.mxu0 %v614
    %832 = vmatprep.subr.bf16.mxu0 0
    %833 = vmatpush1.bf16.msra.mxu0 %v615
    %834 = vmatprep.subr.bf16.mxu0 0
    %835 = vmatpush1.bf16.msra.mxu0 %v616
    %836 = vmatprep.subr.bf16.mxu0 0
    %837 = vmatpush1.bf16.msra.mxu0 %v617
    %838 = vmatprep.subr.bf16.mxu0 0
    %839 = vmatpush1.bf16.msra.mxu0 %v618
    %840 = vmatprep.subr.bf16.mxu0 0
    %841 = vmatpush1.bf16.msra.mxu0 %v619
    %842 = vmatprep.subr.bf16.mxu0 0
    %843 = vmatpush1.bf16.msra.mxu0 %v620
    %844 = vmatprep.subr.bf16.mxu0 0
    %845 = vmatpush1.bf16.msra.mxu0 %v621
    %846 = vmatprep.mubr.bf16.mxu0 %v100
    %847 = vmatmul.mubr.bf16.gmra.mrb[0].mxu0 %v99
    %v848 = vpop.f32.mrb[0].mxu0
    %v849 = vadd.f32 %v809, %v848
    %v850 = vpop.f32.mrb[0].mxu0
    %v851 = vpop.f32.mrb[0].mxu0
    %v852 = vpop.f32.mrb[0].mxu0
    %853 = vdwg.mxu0
    %854 = vmatprep.subr.bf16.mxu0 0
    %855 = vmatpush1.bf16.msra.mxu0 %v622
    %856 = vmatprep.subr.bf16.mxu0 0
    %857 = vmatpush1.bf16.msra.mxu0 %v623
    %858 = vmatprep.subr.bf16.mxu0 0
    %859 = vmatpush1.bf16.msra.mxu0 %v624
    %860 = vmatprep.subr.bf16.mxu0 0
    %861 = vmatpush1.bf16.msra.mxu0 %v625
    %862 = vmatprep.subr.bf16.mxu0 0
    %863 = vmatpush1.bf16.msra.mxu0 %v626
    %864 = vmatprep.subr.bf16.mxu0 0
    %865 = vmatpush1.bf16.msra.mxu0 %v627
    %866 = vmatprep.subr.bf16.mxu0 0
    %867 = vmatpush1.bf16.msra.mxu0 %v628
    %868 = vmatprep.subr.bf16.mxu0 0
    %869 = vmatpush1.bf16.msra.mxu0 %v629
    %870 = vmatprep.subr.bf16.mxu0 0
    %871 = vmatpush1.bf16.msra.mxu0 %v630
    %872 = vmatprep.subr.bf16.mxu0 0
    %873 = vmatpush1.bf16.msra.mxu0 %v631
    %874 = vmatprep.subr.bf16.mxu0 0
    %875 = vmatpush1.bf16.msra.mxu0 %v632
    %876 = vmatprep.subr.bf16.mxu0 0
    %877 = vmatpush1.bf16.msra.mxu0 %v633
    %878 = vmatprep.subr.bf16.mxu0 0
    %879 = vmatpush1.bf16.msra.mxu0 %v634
    %880 = vmatprep.subr.bf16.mxu0 0
    %881 = vmatpush1.bf16.msra.mxu0 %v635
    %882 = vmatprep.subr.bf16.mxu0 0
    %883 = vmatpush1.bf16.msra.mxu0 %v636
    %884 = vmatprep.subr.bf16.mxu0 0
    %885 = vmatpush1.bf16.msra.mxu0 %v637
    %886 = vmatprep.mubr.bf16.mxu0 %v102
    %887 = vmatmul.mubr.bf16.gmra.mrb[0].mxu0 %v101
    %v888 = vpop.f32.mrb[0].mxu0
    %v889 = vadd.f32 %v849, %v888
    %v890 = vpop.f32.mrb[0].mxu0
    %v891 = vpop.f32.mrb[0].mxu0
    %v892 = vpop.f32.mrb[0].mxu0
    %893 = vdwg.mxu0
    %894 = vmatprep.subr.bf16.mxu0 0
    %895 = vmatpush1.bf16.msra.mxu0 %v638
    %896 = vmatprep.subr.bf16.mxu0 0
    %897 = vmatpush1.bf16.msra.mxu0 %v639
    %898 = vmatprep.subr.bf16.mxu0 0
    %899 = vmatpush1.bf16.msra.mxu0 %v640
    %900 = vmatprep.subr.bf16.mxu0 0
    %901 = vmatpush1.bf16.msra.mxu0 %v641
    %902 = vmatprep.subr.bf16.mxu0 0
    %903 = vmatpush1.bf16.msra.mxu0 %v642
    %904 = vmatprep.subr.bf16.mxu0 0
    %905 = vmatpush1.bf16.msra.mxu0 %v643
    %906 = vmatprep.subr.bf16.mxu0 0
    %907 = vmatpush1.bf16.msra.mxu0 %v644
    %908 = vmatprep.subr.bf16.mxu0 0
    %909 = vmatpush1.bf16.msra.mxu0 %v645
    %910 = vmatprep.subr.bf16.mxu0 0
    %911 = vmatpush1.bf16.msra.mxu0 %v646
    %912 = vmatprep.subr.bf16.mxu0 0
    %913 = vmatpush1.bf16.msra.mxu0 %v647
    %914 = vmatprep.subr.bf16.mxu0 0
    %915 = vmatpush1.bf16.msra.mxu0 %v648
    %916 = vmatprep.subr.bf16.mxu0 0
    %917 = vmatpush1.bf16.msra.mxu0 %v649
    %918 = vmatprep.subr.bf16.mxu0 0
    %919 = vmatpush1.bf16.msra.mxu0 %v650
    %920 = vmatprep.subr.bf16.mxu0 0
    %921 = vmatpush1.bf16.msra.mxu0 %v651
    %922 = vmatprep.subr.bf16.mxu0 0
    %923 = vmatpush1.bf16.msra.mxu0 0
    %924 = vmatprep.subr.bf16.mxu0 0
    %925 = vmatpush1.bf16.msra.mxu0 0
    %926 = vmatprep.mubr.bf16.mxu0 %v732
    %927 = vmatmul.mubr.bf16.gmra.mrb[0].mxu0 %v103
    %v928 = vpop.f32.mrb[0].mxu0
    %v929 = vadd.f32 %v889, %v928
    %v930 = vpop.f32.mrb[0].mxu0
    %v931 = vpop.f32.mrb[0].mxu0
    %v932 = vpop.f32.mrb[0].mxu0
    %933 = vdwg.mxu0
    %934 = vst [vmem:[%s3] sm:$0x1] %v929
    // Predicated region
    $region22: #{conv2d_1x1.1} parent=1 // pred_check
      _
    $region23: #{conv2d_1x1.1} parent=1 // pred_check_branch
      %936 = sbr.rel (0) target = $region25
    $region24: #{conv2d_1x1.1} parent=1 // pred_region
      _
    $region25: #{conv2d_1x1.1} parent=1 // pred_fallthru
      _
    // Predicated region
    $region26: #{conv2d_1x1.1} parent=1 // pred_check
      _
    $region27: #{conv2d_1x1.1} parent=1 // pred_check_branch
      %938 = sbr.rel (0) target = $region29
    $region28: #{conv2d_1x1.1} parent=1 // pred_region
      _
    $region29: #{conv2d_1x1.1} parent=1 // pred_fallthru
      _
    %939 = vsyncpa [#allocation3], 1
    %940 = vsyncpa [#allocation5], 1

</llo_original>
